<compile_context>
chip_gen: v5e
topology: v5e:2x2
jax: 0.10.0
libtpu: 0.0.40
codegen_flags: <defaults>
</compile_context>

<pallas_src>
import jax
import jax.numpy as jnp
from jax.experimental import pallas as pl
from jax.experimental.pallas import tpu as pltpu


def _cam_reduce_kernel(y_ref, x_ref, out_ref):
    """Per-(batch, channel-tile) spatial reductions.

    y_ref   : (B,) int32 in SMEM (scalar-prefetched labels)
    x_ref   : (1, tC, S) f32 block   (channels on sublanes, spatial on lanes)
    out_ref : (1, tC, 3) f32 block   [:, :, 0]=b, [:, :, 1]=x1 (y masked to -inf),
                                     [:, :, 2]=count(x > 0) (y zeroed)
    """
    bi = pl.program_id(0)
    ci = pl.program_id(1)
    x = x_ref[0]                                       # (tC, S) f32, single tile load
    tc, s = x.shape
    inv_s = 1.0 / float(s)

    # Spatial (lane-axis) reductions. All reuse the same loaded tile.
    m = jnp.max(x, axis=1, keepdims=True)                                  # (tC, 1)
    row_sum = jnp.sum(x, axis=1, keepdims=True)                            # (tC, 1)
    pos_cnt = jnp.sum((x > 0.0).astype(jnp.float32), axis=1, keepdims=True)  # (tC, 1)
    lse = jnp.log(jnp.sum(jnp.exp(x - m), axis=1, keepdims=True)) + m      # (tC, 1)

    # sum_s(-log_softmax(x)_s) / S  ==  logsumexp_s(x) - mean_s(x)   (T = 1.0)
    b_col = lse - row_sum * inv_s                                          # (tC, 1)

    # Fold the y-channel exclusion in-kernel (no epilogue scatters needed).
    ch_ids = ci * tc + jax.lax.broadcasted_iota(jnp.int32, (tc, 1), 0)     # (tC, 1)
    is_y = ch_ids == y_ref[bi]
    x1_col = jnp.where(is_y, -jnp.inf, row_sum)      # x1[range(B), y] = -inf
    pos_col = jnp.where(is_y, 0.0, pos_cnt)          # index2[range(B), y] = 0

    out_ref[0, :, 0:1] = b_col
    out_ref[0, :, 1:2] = x1_col
    out_ref[0, :, 2:3] = pos_col


def _pick_tc(C, S, budget_bytes=4 * 1024 * 1024):
    """Channel tile: multiple of 8 dividing C, block (tC, S) capped at ~4 MB in VMEM."""
    lane_padded = ((S + 127) // 128) * 128            # lane padding of the block in VMEM
    bytes_per_channel = lane_padded * 4
    max_tc = max(8, budget_bytes // bytes_per_channel)
    for cand in (1024, 512, 256, 128, 64, 32, 16, 8):
        if cand <= max_tc and C % cand == 0:
            return cand
    return C                                          # fallback: whole channel dim


def _cam_reductions(x_bcs, y, tC):
    B, C, S = x_bcs.shape
    return pl.pallas_call(
        _cam_reduce_kernel,
        out_shape=jax.ShapeDtypeStruct((B, C, 3), jnp.float32),
        grid_spec=pltpu.PrefetchScalarGridSpec(
            num_scalar_prefetch=1,
            grid=(B, C // tC),
            in_specs=[pl.BlockSpec((1, tC, S), lambda b, ci, y_ref: (b, ci, 0))],
            out_specs=pl.BlockSpec((1, tC, 3), lambda b, ci, y_ref: (b, ci, 0)),
        ),
        compiler_params=pltpu.CompilerParams(
            dimension_semantics=("parallel", "parallel")),
    )(y, x_bcs)


@jax.jit
def cam_loss_kd_topk(x, y):
    """x: (B, C, H, W) float32 (NCHW, as in PyTorch), y: (B,) int class ids.

    Returns (loss, num_posi) matching the PyTorch module's forward.
    """
    B, C, H, W = x.shape
    S = H * W
    # Contiguous-dims reshape only (no transpose): spatial stays minor / lane-dense.
    x_bcs = x.reshape(B, C, S)

    tC = _pick_tc(C, S)
    packed = _cam_reductions(x_bcs, y.astype(jnp.int32), tC)   # (B, C, 3)
    b_vals = packed[:, :, 0]                                    # (B, C)
    x1_masked = packed[:, :, 1]                                 # y channel already -inf
    pos_cnt = packed[:, :, 2]                                   # y channel already zeroed

    # TODO(synk): torch.topk has no clean Pallas equivalent; jax.lax.top_k (XLA) handles
    # the tiny (B, C) selection. Summing the gathered b values is equivalent to the
    # boolean-mask sum in the reference (top-k indices are distinct).
    _, topk_ind = jax.lax.top_k(x1_masked, 100)
    loss = jnp.sum(jnp.take_along_axis(b_vals, topk_ind, axis=1)) / B

    # Per-channel counts are exact small integers in f32; sum them in int32.
    num_posi = jnp.sum(pos_cnt.astype(jnp.int32))
    return loss, num_posi


if __name__ == "__main__":
    key = jax.random.PRNGKey(0)
    kx, ky = jax.random.split(key)
    # C must be >= 100 because the module hard-codes topk(x1, 100).
    B, C, H, W = 2, 128, 16, 16
    x = jax.random.normal(kx, (B, C, H, W), dtype=jnp.float32)
    y = jax.random.randint(ky, (B,), 0, C, dtype=jnp.int32)

    loss, num_posi = cam_loss_kd_topk(x, y)
    jax.block_until_ready((loss, num_posi))
    print("KERNEL_OK")
</pallas_src>

<mosaic_0001>
module attributes {stable_mosaic.version = 11 : i64} {
  func.func @_cam_reduce_kernel(%arg0: i32, %arg1: i32, %arg2: memref<2xi32, #tpu.memory_space<smem>>, %arg3: memref<1x128x256xf32, #tpu.memory_space<vmem>>, %arg4: memref<1x128x3xf32, #tpu.memory_space<vmem>>) attributes {dimension_semantics = [#tpu.dimension_semantics<parallel>, #tpu.dimension_semantics<parallel>], iteration_bounds = array<i64: 2, 1>, scalar_prefetch = 1 : i64, scratch_operands = 0 : i64, tpu.core_type = #tpu.core_type<tc>, window_params = [{transform_indices = @transform_0, window_bounds = array<i64: 1, 128, 256>}, {transform_indices = @transform_1, window_bounds = array<i64: 1, 128, 3>}]} {
    %c0 = arith.constant 0 : index
    %c0_0 = arith.constant 0 : index
    %c0_1 = arith.constant 0 : index
    %0 = vector.load %arg3[%c0, %c0_0, %c0_1] : memref<1x128x256xf32, #tpu.memory_space<vmem>>, vector<1x128x256xf32>
    %1 = vector.shape_cast %0 : vector<1x128x256xf32> to vector<128x256xf32>
    %cst = arith.constant dense<0xFF800000> : vector<128xf32>
    %2 = vector.multi_reduction <maximumf>, %1, %cst [1] : vector<128x256xf32> to vector<128xf32>
    %3 = vector.shape_cast %2 : vector<128xf32> to vector<128x1xf32>
    %cst_2 = arith.constant dense<0.000000e+00> : vector<128xf32>
    %4 = vector.multi_reduction <add>, %1, %cst_2 [1] : vector<128x256xf32> to vector<128xf32>
    %5 = vector.shape_cast %4 : vector<128xf32> to vector<128x1xf32>
    %cst_3 = arith.constant 0.000000e+00 : f32
    %6 = vector.broadcast %cst_3 : f32 to vector<128x256xf32>
    %7 = arith.cmpf ogt, %1, %6 : vector<128x256xf32>
    %8 = arith.extui %7 : vector<128x256xi1> to vector<128x256xi32>
    %9 = arith.sitofp %8 : vector<128x256xi32> to vector<128x256xf32>
    %cst_4 = arith.constant dense<0.000000e+00> : vector<128xf32>
    %10 = vector.multi_reduction <add>, %9, %cst_4 [1] : vector<128x256xf32> to vector<128xf32>
    %11 = vector.shape_cast %10 : vector<128xf32> to vector<128x1xf32>
    %12 = vector.broadcast %3 : vector<128x1xf32> to vector<128x256xf32>
    %13 = arith.subf %1, %12 : vector<128x256xf32>
    %14 = math.exp %13 : vector<128x256xf32>
    %cst_5 = arith.constant dense<0.000000e+00> : vector<128xf32>
    %15 = vector.multi_reduction <add>, %14, %cst_5 [1] : vector<128x256xf32> to vector<128xf32>
    %16 = vector.shape_cast %15 : vector<128xf32> to vector<128x1xf32>
    %17 = math.log %16 : vector<128x1xf32>
    %18 = arith.addf %17, %3 : vector<128x1xf32>
    %cst_6 = arith.constant 3.906250e-03 : f32
    %19 = vector.broadcast %cst_6 : f32 to vector<128x1xf32>
    %20 = arith.mulf %5, %19 : vector<128x1xf32>
    %21 = arith.subf %18, %20 : vector<128x1xf32>
    %c128_i32 = arith.constant 128 : i32
    %22 = arith.muli %arg1, %c128_i32 : i32
    %23 = tpu.iota {dimensions = array<i32: 0>} : vector<128x1xi32>
    %24 = vector.broadcast %22 : i32 to vector<128x1xi32>
    %25 = arith.addi %24, %23 : vector<128x1xi32>
    %26 = arith.index_cast %arg0 : i32 to index
    %27 = memref.load %arg2[%26] : memref<2xi32, #tpu.memory_space<smem>>
    %28 = vector.broadcast %27 : i32 to vector<128x1xi32>
    %29 = arith.cmpi eq, %25, %28 : vector<128x1xi32>
    %cst_7 = arith.constant 0xFF800000 : f32
    %30 = vector.broadcast %cst_7 : f32 to vector<128x1xf32>
    %31 = arith.select %29, %30, %5 : vector<128x1xi1>, vector<128x1xf32>
    %cst_8 = arith.constant 0.000000e+00 : f32
    %32 = vector.broadcast %cst_8 : f32 to vector<128x1xf32>
    %33 = arith.select %29, %32, %11 : vector<128x1xi1>, vector<128x1xf32>
    %c0_9 = arith.constant 0 : index
    %c0_10 = arith.constant 0 : index
    %c0_11 = arith.constant 0 : index
    %34 = vector.load %arg4[%c0_9, %c0_10, %c0_11] : memref<1x128x3xf32, #tpu.memory_space<vmem>>, vector<1x128x1xf32>
    %35 = vector.shape_cast %34 : vector<1x128x1xf32> to vector<128x1xf32>
    %36 = vector.shape_cast %21 : vector<128x1xf32> to vector<1x128x1xf32>
    tpu.vector_store %arg4[%c0_9, %c0_10, %c0_11], %36 {strides = array<i32>} : memref<1x128x3xf32, #tpu.memory_space<vmem>>, vector<1x128x1xf32>,
    %c0_12 = arith.constant 0 : index
    %c0_13 = arith.constant 0 : index
    %c1 = arith.constant 1 : index
    %37 = vector.load %arg4[%c0_12, %c0_13, %c1] : memref<1x128x3xf32, #tpu.memory_space<vmem>>, vector<1x128x1xf32>
    %38 = vector.shape_cast %37 : vector<1x128x1xf32> to vector<128x1xf32>
    %39 = vector.shape_cast %31 : vector<128x1xf32> to vector<1x128x1xf32>
    tpu.vector_store %arg4[%c0_12, %c0_13, %c1], %39 {strides = array<i32>} : memref<1x128x3xf32, #tpu.memory_space<vmem>>, vector<1x128x1xf32>,
    %c0_14 = arith.constant 0 : index
    %c0_15 = arith.constant 0 : index
    %c2 = arith.constant 2 : index
    %40 = vector.load %arg4[%c0_14, %c0_15, %c2] : memref<1x128x3xf32, #tpu.memory_space<vmem>>, vector<1x128x1xf32>
    %41 = vector.shape_cast %40 : vector<1x128x1xf32> to vector<128x1xf32>
    %42 = vector.shape_cast %33 : vector<128x1xf32> to vector<1x128x1xf32>
    tpu.vector_store %arg4[%c0_14, %c0_15, %c2], %42 {strides = array<i32>} : memref<1x128x3xf32, #tpu.memory_space<vmem>>, vector<1x128x1xf32>,
    return
  }
  func.func @transform_0(%arg0: i32, %arg1: i32, %arg2: memref<2xi32, #tpu.memory_space<smem>>) -> (i32, i32, i32) {
    %c0_i32 = arith.constant 0 : i32
    %c0_i32_0 = arith.constant 0 : i32
    return %arg0, %arg1, %c0_i32 : i32, i32, i32
  }
  func.func @transform_1(%arg0: i32, %arg1: i32, %arg2: memref<2xi32, #tpu.memory_space<smem>>) -> (i32, i32, i32) {
    %c0_i32 = arith.constant 0 : i32
    %c0_i32_0 = arith.constant 0 : i32
    return %arg0, %arg1, %c0_i32 : i32, i32, i32
  }
}

</mosaic_0001>

<llo_original>
// kernel: cam_loss_kd_topk.1
$region0: #{cam_loss_kd_topk.1}
  #allocation0 [shape = 'u32[]', space=smem, size = 0x4, offset = 0x4, fixed_abs, tag = 'smem constant byte address 0x4 - core index']
  #allocation1 [shape = 'u32[72,128]{1,0:T(1,128)}', space=vmem, size = 0x9000, scoped, tag = 'internal scratch']
  #allocation2 [shape = 's32[1]{0}', space=sflag, size = 0x4, scoped, tag = 'scoped memory for cam_loss_kd_topk.1']
  #allocation3 [shape = 'u8[512]{0}', space=smem, size = 0x200, scoped, tag = 'prefetched SMEM operand 0']
  %s0 = inlined_call_operand.vmem [shape: s32[2], index: 0, kind: input, shape index: {}]
  %s1 = inlined_call_operand.vmem [shape: f32[2,128,256], index: 1, kind: input, shape index: {}]
  %s2 = inlined_call_operand.vmem [shape: f32[2,128,3], index: 2, kind: output, shape index: {}]
  %s3 = sld [smem:[#allocation0]]
  $region37: #{cam_loss_kd_topk.1} parent=0
    _
  %s5 = ssub.s32 1, %s3
  %s6 = scalar_select 0, %s5, %s3
  %s8 = sshll.u32 %s0, 4
  %s9 = int_to_ptr.vmem [resolvable:$true] %s8
  %11 = dma.vmem_to_smem %s9, 16, [#allocation3], [#allocation2]
  %13 = dma.done [#allocation2], 16
  %14 = sfence
  loop: start=0, step=1, limit=4
  $region2: #{cam_loss_kd_topk.1} parent=0 // loop_pre_header
    _
  $region3: #{cam_loss_kd_topk.1} parent=0 // loop_header
    %s16 = sphi 0, %s20
    %p17 = scmp.ge.s32.totalorder %s16, 4
    %s23 = sphi 0, %s35
    %s24 = sphi 0, %s31
    %s25 = sphi 0, %s23
    %s26 = sphi 0, %s24
    %s27 = sphi 0, %s25
    %s28 = sphi 0, %s26
    %s40 = sphi 0, %s42
    %s43 = sphi 0, %s40
    %s44 = sphi 0, %s43
    %s60 = sphi 0, %s44
    %s68 = sphi 0, %s70
    %s71 = sphi 0, %s68
    %s72 = sphi 0, %s71
    %s88 = sphi 0, %s72
  $region4: #{cam_loss_kd_topk.1} parent=0 // loop_header_branch
    %19 = sbr.rel (%p17) target = $region8
  $region5: #{cam_loss_kd_topk.1} parent=0 // loop_body
    %s21 = ssub.s32 %s16, 1
    %s22 = ssub.s32 %s16, 2
    %s29 = sadd.s32 1, %s24
    %p30 = scmp.ge.s32.totalorder %s29, 1
    %s31 = scalar_select %p30, 0, %s29
    %s32 = sadd.s32 1, %s23
    %s33 = scalar_select %p30, %s32, %s23
    %p34 = scmp.ge.s32.totalorder %s33, 2
    %s35 = scalar_select %p34, 0, %s33
    %s36 = ssub.s32 %s23, %s35
    %s37 = ssub.s32 %s24, %s31
    %s38 = sor.u32 %s36, %s37
    %p39 = scmp.eq.s32.totalorder %s38, 0
    %s41 = sadd.s32 %s40, 1
    %s42 = scalar_select %p39, %s40, %s41
    %p45 = pneg %p39
    %p46 = scmp.eq.s32.totalorder %s16, 1
    %p47 = por %p45, %p46
    %p48 = scmp.ne.s32.totalorder %s40, %s43
    %p49 = scmp.eq.s32.totalorder %s16, 0
    %p50 = por %p48, %p49
    %p51 = scmp.ne.s32.totalorder %s40, %s43
    %p52 = scmp.eq.s32.totalorder %s21, 1
    %p53 = por %p51, %p52
    %p54 = scmp.ne.s32.totalorder %s43, %s44
    %p55 = scmp.eq.s32.totalorder %s21, 0
    %p56 = por %p54, %p55
    %p57 = scmp.ne.s32.totalorder %s43, %s44
    %p58 = scmp.eq.s32.totalorder %s22, 1
    %p59 = por %p57, %p58
    %p61 = scmp.ne.s32.totalorder %s44, %s60
    %p62 = scmp.eq.s32.totalorder %s22, 0
    %p63 = por %p61, %p62
    %s64 = ssub.s32 %s23, %s35
    %s65 = ssub.s32 %s24, %s31
    %s66 = sor.u32 %s64, %s65
    %p67 = scmp.eq.s32.totalorder %s66, 0
    %s69 = sadd.s32 %s68, 1
    %s70 = scalar_select %p67, %s68, %s69
    %p73 = pneg %p67
    %p74 = scmp.eq.s32.totalorder %s16, 1
    %p75 = por %p73, %p74
    %p76 = scmp.ne.s32.totalorder %s68, %s71
    %p77 = scmp.eq.s32.totalorder %s16, 0
    %p78 = por %p76, %p77
    %p79 = scmp.ne.s32.totalorder %s68, %s71
    %p80 = scmp.eq.s32.totalorder %s21, 1
    %p81 = por %p79, %p80
    %p82 = scmp.ne.s32.totalorder %s71, %s72
    %p83 = scmp.eq.s32.totalorder %s21, 0
    %p84 = por %p82, %p83
    %p85 = scmp.ne.s32.totalorder %s71, %s72
    %p86 = scmp.eq.s32.totalorder %s22, 1
    %p87 = por %p85, %p86
    %p89 = scmp.ne.s32.totalorder %s72, %s88
    %p90 = scmp.eq.s32.totalorder %s22, 0
    %p91 = por %p89, %p90
    %p92 = scmp.le.s32.totalorder 1, %s16
    %p93 = scmp.lt.s32.totalorder %s16, 3
    %p94 = pnand %p92, %p93
    %p95 = pneg %p94
    // Predicated region
    $region9: #{cam_loss_kd_topk.1} parent=5 // pred_check
      _
    $region10: #{cam_loss_kd_topk.1} parent=5 // pred_check_branch
      %97 = sbr.rel (%p94) target = $region12
    $region11: #{cam_loss_kd_topk.1} parent=5 // pred_region
      %s98 = ssub.s32 %s16, 1
    $region12: #{cam_loss_kd_topk.1} parent=5 // pred_fallthru
      _
    %p99 = scmp.lt.s32.totalorder %s16, 2
    // Predicated region
    $region13: #{cam_loss_kd_topk.1} parent=5 // pred_check
      %p100 = pneg %p99
    $region14: #{cam_loss_kd_topk.1} parent=5 // pred_check_branch
      %102 = sbr.rel (%p100) target = $region16
    $region15: #{cam_loss_kd_topk.1} parent=5 // pred_region
      // Predicated region
      $region17: #{cam_loss_kd_topk.1} parent=15 // pred_check
        %p103 = pneg %p50
      $region18: #{cam_loss_kd_topk.1} parent=15 // pred_check_branch
        %105 = sbr.rel (%p103) target = $region20
      $region19: #{cam_loss_kd_topk.1} parent=15 // pred_region
        %s106 = smul.u32 16, %s24
        %p107 = scmp.lt.s32.totalorder %s23, 1
        %s108 = scalar_select %p107, %s23, 1
        %p109 = scmp.lt.s32.totalorder %s106, 15
        %s110 = scalar_select %p109, %s106, 15
        %s111 = smul.addr %s110, 2
        %s112 = smul.addr %s108, 32
        %s113 = sadd.s32 %s111, %s112
        %s114 = smul.addr %s113, 8
        %s115 = scalar_lea.vmem %s1, %s114
        %s116 = smul.u32 16, %s24
      $region20: #{cam_loss_kd_topk.1} parent=15 // pred_fallthru
        _
    $region16: #{cam_loss_kd_topk.1} parent=5 // pred_fallthru
      _
    %p117 = scmp.le.s32.totalorder 1, %s16
    %p118 = scmp.lt.s32.totalorder %s16, 3
    %p119 = pnand %p117, %p118
    %p120 = pneg %p119
    // Predicated region
    $region21: #{cam_loss_kd_topk.1} parent=5 // pred_check
      _
    $region22: #{cam_loss_kd_topk.1} parent=5 // pred_check_branch
      %122 = sbr.rel (%p119) target = $region24
    $region23: #{cam_loss_kd_topk.1} parent=5 // pred_region
      %s123 = ssub.s32 %s16, 1
      %s124 = smul.u32 16, %s26
      %p125 = scmp.lt.s32.totalorder %s25, 1
      %s126 = scalar_select %p125, %s25, 1
      %p127 = scmp.lt.s32.totalorder %s124, 15
      %s128 = scalar_select %p127, %s124, 15
      %s129 = smul.addr %s128, 2
      %s130 = smul.addr %s126, 32
      %s131 = sadd.s32 %s129, %s130
      %s132 = smul.addr %s131, 8
      %s133 = scalar_lea.vmem %s1, %s132
      %p134 = pneg %p56
      %p135 = pneg %p53
      %p136 = pneg %p84
      %p137 = pneg %p81
      %s138 = smul.u32 16, %s26
      %p139 = scmp.lt.s32.totalorder %s25, 1
      %s140 = scalar_select %p139, %s25, 1
      %p141 = scmp.lt.s32.totalorder %s138, 15
      %s142 = scalar_select %p141, %s138, 15
      %s143 = smul.addr %s140, 16
      %s144 = sadd.s32 %s142, %s143
      %s145 = smul.addr %s144, 8
      %s146 = scalar_lea.vmem %s2, %s145
      %s147 = smul.u32 16, %s26
      %p148 = scmp.lt.s32.totalorder %s25, 1
      %s149 = scalar_select %p148, %s25, 1
      %p150 = scmp.lt.s32.totalorder %s147, 15
      %s151 = scalar_select %p150, %s147, 15
      %s152 = smul.addr %s151, 2
      %s153 = smul.addr %s149, 32
      %s154 = sadd.s32 %s152, %s153
      %s155 = smul.addr %s154, 8
      %s156 = scalar_lea.vmem %s1, %s155
      %s157 = smul.u32 16, %s26
      %s158 = smul.u32 16, %s26
      %p159 = scmp.lt.s32.totalorder %s25, 1
      %s160 = scalar_select %p159, %s25, 1
      %p161 = scmp.lt.s32.totalorder %s158, 15
      %s162 = scalar_select %p161, %s158, 15
      %s163 = smul.addr %s160, 16
      %s164 = sadd.s32 %s162, %s163
      %s165 = smul.addr %s164, 8
      %s166 = scalar_lea.vmem %s2, %s165
      %s167 = smul.u32 16, %s26
      %v168 = vld [vmem:[%s156] sm:$0xff]
      %v169 = vld [vmem:[%s156 + $0x8] sm:$0xff]
      %v170 = vld [vmem:[%s156 + $0x10] sm:$0xff]
      %v171 = vld [vmem:[%s156 + $0x18] sm:$0xff]
      %v172 = vld [vmem:[%s156 + $0x20] sm:$0xff]
      %v173 = vld [vmem:[%s156 + $0x28] sm:$0xff]
      %v174 = vld [vmem:[%s156 + $0x30] sm:$0xff]
      %v175 = vld [vmem:[%s156 + $0x38] sm:$0xff]
      %v176 = vld [vmem:[%s156 + $0x40] sm:$0xff]
      %v177 = vld [vmem:[%s156 + $0x48] sm:$0xff]
      %v178 = vld [vmem:[%s156 + $0x50] sm:$0xff]
      %v179 = vld [vmem:[%s156 + $0x58] sm:$0xff]
      %v180 = vld [vmem:[%s156 + $0x60] sm:$0xff]
      %v181 = vld [vmem:[%s156 + $0x68] sm:$0xff]
      %v182 = vld [vmem:[%s156 + $0x70] sm:$0xff]
      %v183 = vld [vmem:[%s156 + $0x78] sm:$0xff]
      %v184 = vld [vmem:[%s156 + $0x80] sm:$0xff]
      %v185 = vld [vmem:[%s156 + $0x88] sm:$0xff]
      %v186 = vld [vmem:[%s156 + $0x90] sm:$0xff]
      %v187 = vld [vmem:[%s156 + $0x98] sm:$0xff]
      %v188 = vld [vmem:[%s156 + $0xa0] sm:$0xff]
      %v189 = vld [vmem:[%s156 + $0xa8] sm:$0xff]
      %v190 = vld [vmem:[%s156 + $0xb0] sm:$0xff]
      %v191 = vld [vmem:[%s156 + $0xb8] sm:$0xff]
      %v192 = vld [vmem:[%s156 + $0xc0] sm:$0xff]
      %v193 = vld [vmem:[%s156 + $0xc8] sm:$0xff]
      %v194 = vld [vmem:[%s156 + $0xd0] sm:$0xff]
      %v195 = vld [vmem:[%s156 + $0xd8] sm:$0xff]
      %v196 = vld [vmem:[%s156 + $0xe0] sm:$0xff]
      %v197 = vld [vmem:[%s156 + $0xe8] sm:$0xff]
      %v198 = vld [vmem:[%s156 + $0xf0] sm:$0xff]
      %v199 = vld [vmem:[%s156 + $0xf8] sm:$0xff]
      %v200 = vmax.f32 %v168, %v169
      %201 = vmax.xlane.f32.xlu0 %v200
      %v202 = vpop.xlane.xlu0 %201
      %v203 = vmax.f32 %v170, %v171
      %204 = vmax.xlane.f32.xlu0 %v203
      %v205 = vpop.xlane.xlu0 %204
      %v206 = vmax.f32 %v172, %v173
      %207 = vmax.xlane.f32.xlu0 %v206
      %v208 = vpop.xlane.xlu0 %207
      %v209 = vmax.f32 %v174, %v175
      %210 = vmax.xlane.f32.xlu0 %v209
      %v211 = vpop.xlane.xlu0 %210
      %v212 = vmax.f32 %v176, %v177
      %213 = vmax.xlane.f32.xlu0 %v212
      %v214 = vpop.xlane.xlu0 %213
      %v215 = vmax.f32 %v178, %v179
      %216 = vmax.xlane.f32.xlu0 %v215
      %v217 = vpop.xlane.xlu0 %216
      %v218 = vmax.f32 %v180, %v181
      %219 = vmax.xlane.f32.xlu0 %v218
      %v220 = vpop.xlane.xlu0 %219
      %v221 = vmax.f32 %v182, %v183
      %222 = vmax.xlane.f32.xlu0 %v221
      %v223 = vpop.xlane.xlu0 %222
      %v224 = vmax.f32 %v184, %v185
      %225 = vmax.xlane.f32.xlu0 %v224
      %v226 = vpop.xlane.xlu0 %225
      %v227 = vmax.f32 %v186, %v187
      %228 = vmax.xlane.f32.xlu0 %v227
      %v229 = vpop.xlane.xlu0 %228
      %v230 = vmax.f32 %v188, %v189
      %231 = vmax.xlane.f32.xlu0 %v230
      %v232 = vpop.xlane.xlu0 %231
      %v233 = vmax.f32 %v190, %v191
      %234 = vmax.xlane.f32.xlu0 %v233
      %v235 = vpop.xlane.xlu0 %234
      %v236 = vmax.f32 %v192, %v193
      %237 = vmax.xlane.f32.xlu0 %v236
      %v238 = vpop.xlane.xlu0 %237
      %v239 = vmax.f32 %v194, %v195
      %240 = vmax.xlane.f32.xlu0 %v239
      %v241 = vpop.xlane.xlu0 %240
      %v242 = vmax.f32 %v196, %v197
      %243 = vmax.xlane.f32.xlu0 %v242
      %v244 = vpop.xlane.xlu0 %243
      %v245 = vmax.f32 %v198, %v199
      %246 = vmax.xlane.f32.xlu0 %v245
      %v247 = vpop.xlane.xlu0 %246
      %v248 = vadd.f32 %v168, %v169
      %249 = vadd.xlane.f32.xlu0 %v248
      %v250 = vpop.xlane.xlu0 %249
      %v251 = vadd.f32 %v170, %v171
      %252 = vadd.xlane.f32.xlu0 %v251
      %v253 = vpop.xlane.xlu0 %252
      %v254 = vadd.f32 %v172, %v173
      %255 = vadd.xlane.f32.xlu0 %v254
      %v256 = vpop.xlane.xlu0 %255
      %v257 = vadd.f32 %v174, %v175
      %258 = vadd.xlane.f32.xlu0 %v257
      %v259 = vpop.xlane.xlu0 %258
      %v260 = vadd.f32 %v176, %v177
      %261 = vadd.xlane.f32.xlu0 %v260
      %v262 = vpop.xlane.xlu0 %261
      %v263 = vadd.f32 %v178, %v179
      %264 = vadd.xlane.f32.xlu0 %v263
      %v265 = vpop.xlane.xlu0 %264
      %v266 = vadd.f32 %v180, %v181
      %267 = vadd.xlane.f32.xlu0 %v266
      %v268 = vpop.xlane.xlu0 %267
      %v269 = vadd.f32 %v182, %v183
      %270 = vadd.xlane.f32.xlu0 %v269
      %v271 = vpop.xlane.xlu0 %270
      %v272 = vadd.f32 %v184, %v185
      %273 = vadd.xlane.f32.xlu0 %v272
      %v274 = vpop.xlane.xlu0 %273
      %v275 = vadd.f32 %v186, %v187
      %276 = vadd.xlane.f32.xlu0 %v275
      %v277 = vpop.xlane.xlu0 %276
      %v278 = vadd.f32 %v188, %v189
      %279 = vadd.xlane.f32.xlu0 %v278
      %v280 = vpop.xlane.xlu0 %279
      %v281 = vadd.f32 %v190, %v191
      %282 = vadd.xlane.f32.xlu0 %v281
      %v283 = vpop.xlane.xlu0 %282
      %v284 = vadd.f32 %v192, %v193
      %285 = vadd.xlane.f32.xlu0 %v284
      %v286 = vpop.xlane.xlu0 %285
      %v287 = vadd.f32 %v194, %v195
      %288 = vadd.xlane.f32.xlu0 %v287
      %v289 = vpop.xlane.xlu0 %288
      %v290 = vadd.f32 %v196, %v197
      %291 = vadd.xlane.f32.xlu0 %v290
      %v292 = vpop.xlane.xlu0 %291
      %v293 = vadd.f32 %v198, %v199
      %294 = vadd.xlane.f32.xlu0 %v293
      %v295 = vpop.xlane.xlu0 %294
      %vm296 = vcmp.gt.f32.partialorder %v168, 0.0
      %vm297 = vcmp.gt.f32.partialorder %v169, 0.0
      %vm298 = vcmp.gt.f32.partialorder %v170, 0.0
      %vm299 = vcmp.gt.f32.partialorder %v171, 0.0
      %vm300 = vcmp.gt.f32.partialorder %v172, 0.0
      %vm301 = vcmp.gt.f32.partialorder %v173, 0.0
      %vm302 = vcmp.gt.f32.partialorder %v174, 0.0
      %vm303 = vcmp.gt.f32.partialorder %v175, 0.0
      %vm304 = vcmp.gt.f32.partialorder %v176, 0.0
      %vm305 = vcmp.gt.f32.partialorder %v177, 0.0
      %vm306 = vcmp.gt.f32.partialorder %v178, 0.0
      %vm307 = vcmp.gt.f32.partialorder %v179, 0.0
      %vm308 = vcmp.gt.f32.partialorder %v180, 0.0
      %vm309 = vcmp.gt.f32.partialorder %v181, 0.0
      %vm310 = vcmp.gt.f32.partialorder %v182, 0.0
      %vm311 = vcmp.gt.f32.partialorder %v183, 0.0
      %vm312 = vcmp.gt.f32.partialorder %v184, 0.0
      %vm313 = vcmp.gt.f32.partialorder %v185, 0.0
      %vm314 = vcmp.gt.f32.partialorder %v186, 0.0
      %vm315 = vcmp.gt.f32.partialorder %v187, 0.0
      %vm316 = vcmp.gt.f32.partialorder %v188, 0.0
      %vm317 = vcmp.gt.f32.partialorder %v189, 0.0
      %vm318 = vcmp.gt.f32.partialorder %v190, 0.0
      %vm319 = vcmp.gt.f32.partialorder %v191, 0.0
      %vm320 = vcmp.gt.f32.partialorder %v192, 0.0
      %vm321 = vcmp.gt.f32.partialorder %v193, 0.0
      %vm322 = vcmp.gt.f32.partialorder %v194, 0.0
      %vm323 = vcmp.gt.f32.partialorder %v195, 0.0
      %vm324 = vcmp.gt.f32.partialorder %v196, 0.0
      %vm325 = vcmp.gt.f32.partialorder %v197, 0.0
      %vm326 = vcmp.gt.f32.partialorder %v198, 0.0
      %vm327 = vcmp.gt.f32.partialorder %v199, 0.0
      %v328 = vsel %vm296, 1, 0
      %v329 = vsel %vm297, 1, 0
      %v330 = vsel %vm298, 1, 0
      %v331 = vsel %vm299, 1, 0
      %v332 = vsel %vm300, 1, 0
      %v333 = vsel %vm301, 1, 0
      %v334 = vsel %vm302, 1, 0
      %v335 = vsel %vm303, 1, 0
      %v336 = vsel %vm304, 1, 0
      %v337 = vsel %vm305, 1, 0
      %v338 = vsel %vm306, 1, 0
      %v339 = vsel %vm307, 1, 0
      %v340 = vsel %vm308, 1, 0
      %v341 = vsel %vm309, 1, 0
      %v342 = vsel %vm310, 1, 0
      %v343 = vsel %vm311, 1, 0
      %v344 = vsel %vm312, 1, 0
      %v345 = vsel %vm313, 1, 0
      %v346 = vsel %vm314, 1, 0
      %v347 = vsel %vm315, 1, 0
      %v348 = vsel %vm316, 1, 0
      %v349 = vsel %vm317, 1, 0
      %v350 = vsel %vm318, 1, 0
      %v351 = vsel %vm319, 1, 0
      %v352 = vsel %vm320, 1, 0
      %v353 = vsel %vm321, 1, 0
      %v354 = vsel %vm322, 1, 0
      %v355 = vsel %vm323, 1, 0
      %v356 = vsel %vm324, 1, 0
      %v357 = vsel %vm325, 1, 0
      %v358 = vsel %vm326, 1, 0
      %v359 = vsel %vm327, 1, 0
      %v360 = vcvt.s32.f32 %v328
      %v361 = vcvt.s32.f32 %v329
      %v362 = vcvt.s32.f32 %v330
      %v363 = vcvt.s32.f32 %v331
      %v364 = vcvt.s32.f32 %v332
      %v365 = vcvt.s32.f32 %v333
      %v366 = vcvt.s32.f32 %v334
      %v367 = vcvt.s32.f32 %v335
      %v368 = vcvt.s32.f32 %v336
      %v369 = vcvt.s32.f32 %v337
      %v370 = vcvt.s32.f32 %v338
      %v371 = vcvt.s32.f32 %v339
      %v372 = vcvt.s32.f32 %v340
      %v373 = vcvt.s32.f32 %v341
      %v374 = vcvt.s32.f32 %v342
      %v375 = vcvt.s32.f32 %v343
      %v376 = vcvt.s32.f32 %v344
      %v377 = vcvt.s32.f32 %v345
      %v378 = vcvt.s32.f32 %v346
      %v379 = vcvt.s32.f32 %v347
      %v380 = vcvt.s32.f32 %v348
      %v381 = vcvt.s32.f32 %v349
      %v382 = vcvt.s32.f32 %v350
      %v383 = vcvt.s32.f32 %v351
      %v384 = vcvt.s32.f32 %v352
      %v385 = vcvt.s32.f32 %v353
      %v386 = vcvt.s32.f32 %v354
      %v387 = vcvt.s32.f32 %v355
      %v388 = vcvt.s32.f32 %v356
      %v389 = vcvt.s32.f32 %v357
      %v390 = vcvt.s32.f32 %v358
      %v391 = vcvt.s32.f32 %v359
      %v392 = vadd.f32 %v360, %v361
      %393 = vadd.xlane.f32.xlu0 %v392
      %v394 = vpop.xlane.xlu0 %393
      %v395 = vadd.f32 %v362, %v363
      %396 = vadd.xlane.f32.xlu0 %v395
      %v397 = vpop.xlane.xlu0 %396
      %v398 = vadd.f32 %v364, %v365
      %399 = vadd.xlane.f32.xlu0 %v398
      %v400 = vpop.xlane.xlu0 %399
      %v401 = vadd.f32 %v366, %v367
      %402 = vadd.xlane.f32.xlu0 %v401
      %v403 = vpop.xlane.xlu0 %402
      %v404 = vadd.f32 %v368, %v369
      %405 = vadd.xlane.f32.xlu0 %v404
      %v406 = vpop.xlane.xlu0 %405
      %v407 = vadd.f32 %v370, %v371
      %408 = vadd.xlane.f32.xlu0 %v407
      %v409 = vpop.xlane.xlu0 %408
      %v410 = vadd.f32 %v372, %v373
      %411 = vadd.xlane.f32.xlu0 %v410
      %v412 = vpop.xlane.xlu0 %411
      %v413 = vadd.f32 %v374, %v375
      %414 = vadd.xlane.f32.xlu0 %v413
      %v415 = vpop.xlane.xlu0 %414
      %v416 = vadd.f32 %v376, %v377
      %417 = vadd.xlane.f32.xlu0 %v416
      %v418 = vpop.xlane.xlu0 %417
      %v419 = vadd.f32 %v378, %v379
      %420 = vadd.xlane.f32.xlu0 %v419
      %v421 = vpop.xlane.xlu0 %420
      %v422 = vadd.f32 %v380, %v381
      %423 = vadd.xlane.f32.xlu0 %v422
      %v424 = vpop.xlane.xlu0 %423
      %v425 = vadd.f32 %v382, %v383
      %426 = vadd.xlane.f32.xlu0 %v425
      %v427 = vpop.xlane.xlu0 %426
      %v428 = vadd.f32 %v384, %v385
      %429 = vadd.xlane.f32.xlu0 %v428
      %v430 = vpop.xlane.xlu0 %429
      %v431 = vadd.f32 %v386, %v387
      %432 = vadd.xlane.f32.xlu0 %v431
      %v433 = vpop.xlane.xlu0 %432
      %v434 = vadd.f32 %v388, %v389
      %435 = vadd.xlane.f32.xlu0 %v434
      %v436 = vpop.xlane.xlu0 %435
      %v437 = vadd.f32 %v390, %v391
      %438 = vadd.xlane.f32.xlu0 %v437
      %v439 = vpop.xlane.xlu0 %438
      %v440 = vsub.f32 %v168, %v202
      %v441 = vsub.f32 %v169, %v202
      %v442 = vsub.f32 %v170, %v205
      %v443 = vsub.f32 %v171, %v205
      %v444 = vsub.f32 %v172, %v208
      %v445 = vsub.f32 %v173, %v208
      %v446 = vsub.f32 %v174, %v211
      %v447 = vsub.f32 %v175, %v211
      %v448 = vsub.f32 %v176, %v214
      %v449 = vsub.f32 %v177, %v214
      %v450 = vsub.f32 %v178, %v217
      %v451 = vsub.f32 %v179, %v217
      %v452 = vsub.f32 %v180, %v220
      %v453 = vsub.f32 %v181, %v220
      %v454 = vsub.f32 %v182, %v223
      %v455 = vsub.f32 %v183, %v223
      %v456 = vsub.f32 %v184, %v226
      %v457 = vsub.f32 %v185, %v226
      %v458 = vsub.f32 %v186, %v229
      %v459 = vsub.f32 %v187, %v229
      %v460 = vsub.f32 %v188, %v232
      %v461 = vsub.f32 %v189, %v232
      %v462 = vsub.f32 %v190, %v235
      %v463 = vsub.f32 %v191, %v235
      %v464 = vsub.f32 %v192, %v238
      %v465 = vsub.f32 %v193, %v238
      %v466 = vsub.f32 %v194, %v241
      %v467 = vsub.f32 %v195, %v241
      %v468 = vsub.f32 %v196, %v244
      %v469 = vsub.f32 %v197, %v244
      %v470 = vsub.f32 %v198, %v247
      %v471 = vsub.f32 %v199, %v247
      %v472 = vmul.f32 %v440, 1.442695
      %v473 = vpow.pop %v472
      %v474 = vmul.f32 %v441, 1.442695
      %v475 = vpow.pop %v474
      %v476 = vmul.f32 %v442, 1.442695
      %v477 = vpow.pop %v476
      %v478 = vmul.f32 %v443, 1.442695
      %v479 = vpow.pop %v478
      %v480 = vmul.f32 %v444, 1.442695
      %v481 = vpow.pop %v480
      %v482 = vmul.f32 %v445, 1.442695
      %v483 = vpow.pop %v482
      %v484 = vmul.f32 %v446, 1.442695
      %v485 = vpow.pop %v484
      %v486 = vmul.f32 %v447, 1.442695
      %v487 = vpow.pop %v486
      %v488 = vmul.f32 %v448, 1.442695
      %v489 = vpow.pop %v488
      %v490 = vmul.f32 %v449, 1.442695
      %v491 = vpow.pop %v490
      %v492 = vmul.f32 %v450, 1.442695
      %v493 = vpow.pop %v492
      %v494 = vmul.f32 %v451, 1.442695
      %v495 = vpow.pop %v494
      %v496 = vmul.f32 %v452, 1.442695
      %v497 = vpow.pop %v496
      %v498 = vmul.f32 %v453, 1.442695
      %v499 = vpow.pop %v498
      %v500 = vmul.f32 %v454, 1.442695
      %v501 = vpow.pop %v500
      %v502 = vmul.f32 %v455, 1.442695
      %v503 = vpow.pop %v502
      %v504 = vmul.f32 %v456, 1.442695
      %v505 = vpow.pop %v504
      %v506 = vmul.f32 %v457, 1.442695
      %v507 = vpow.pop %v506
      %v508 = vmul.f32 %v458, 1.442695
      %v509 = vpow.pop %v508
      %v510 = vmul.f32 %v459, 1.442695
      %v511 = vpow.pop %v510
      %v512 = vmul.f32 %v460, 1.442695
      %v513 = vpow.pop %v512
      %v514 = vmul.f32 %v461, 1.442695
      %v515 = vpow.pop %v514
      %v516 = vmul.f32 %v462, 1.442695
      %v517 = vpow.pop %v516
      %v518 = vmul.f32 %v463, 1.442695
      %v519 = vpow.pop %v518
      %v520 = vmul.f32 %v464, 1.442695
      %v521 = vpow.pop %v520
      %v522 = vmul.f32 %v465, 1.442695
      %v523 = vpow.pop %v522
      %v524 = vmul.f32 %v466, 1.442695
      %v525 = vpow.pop %v524
      %v526 = vmul.f32 %v467, 1.442695
      %v527 = vpow.pop %v526
      %v528 = vmul.f32 %v468, 1.442695
      %v529 = vpow.pop %v528
      %v530 = vmul.f32 %v469, 1.442695
      %v531 = vpow.pop %v530
      %v532 = vmul.f32 %v470, 1.442695
      %v533 = vpow.pop %v532
      %v534 = vmul.f32 %v471, 1.442695
      %v535 = vpow.pop %v534
      %v536 = vadd.f32 %v473, %v475
      %537 = vadd.xlane.f32.xlu0 %v536
      %v538 = vpop.xlane.xlu0 %537
      %v539 = vadd.f32 %v477, %v479
      %540 = vadd.xlane.f32.xlu0 %v539
      %v541 = vpop.xlane.xlu0 %540
      %v542 = vadd.f32 %v481, %v483
      %543 = vadd.xlane.f32.xlu0 %v542
      %v544 = vpop.xlane.xlu0 %543
      %v545 = vadd.f32 %v485, %v487
      %546 = vadd.xlane.f32.xlu0 %v545
      %v547 = vpop.xlane.xlu0 %546
      %v548 = vadd.f32 %v489, %v491
      %549 = vadd.xlane.f32.xlu0 %v548
      %v550 = vpop.xlane.xlu0 %549
      %v551 = vadd.f32 %v493, %v495
      %552 = vadd.xlane.f32.xlu0 %v551
      %v553 = vpop.xlane.xlu0 %552
      %v554 = vadd.f32 %v497, %v499
      %555 = vadd.xlane.f32.xlu0 %v554
      %v556 = vpop.xlane.xlu0 %555
      %v557 = vadd.f32 %v501, %v503
      %558 = vadd.xlane.f32.xlu0 %v557
      %v559 = vpop.xlane.xlu0 %558
      %v560 = vadd.f32 %v505, %v507
      %561 = vadd.xlane.f32.xlu0 %v560
      %v562 = vpop.xlane.xlu0 %561
      %v563 = vadd.f32 %v509, %v511
      %564 = vadd.xlane.f32.xlu0 %v563
      %v565 = vpop.xlane.xlu0 %564
      %v566 = vadd.f32 %v513, %v515
      %567 = vadd.xlane.f32.xlu0 %v566
      %v568 = vpop.xlane.xlu0 %567
      %v569 = vadd.f32 %v517, %v519
      %570 = vadd.xlane.f32.xlu0 %v569
      %v571 = vpop.xlane.xlu0 %570
      %v572 = vadd.f32 %v521, %v523
      %573 = vadd.xlane.f32.xlu0 %v572
      %v574 = vpop.xlane.xlu0 %573
      %v575 = vadd.f32 %v525, %v527
      %576 = vadd.xlane.f32.xlu0 %v575
      %v577 = vpop.xlane.xlu0 %576
      %v578 = vadd.f32 %v529, %v531
      %579 = vadd.xlane.f32.xlu0 %v578
      %v580 = vpop.xlane.xlu0 %579
      %v581 = vadd.f32 %v533, %v535
      %582 = vadd.xlane.f32.xlu0 %v581
      %v583 = vpop.xlane.xlu0 %582
      %v584 = vlog2.pop %v538
      %v585 = vmul.f32 %v584, 0.6931472
      %v586 = vlog2.pop %v541
      %v587 = vmul.f32 %v586, 0.6931472
      %v588 = vlog2.pop %v544
      %v589 = vmul.f32 %v588, 0.6931472
      %v590 = vlog2.pop %v547
      %v591 = vmul.f32 %v590, 0.6931472
      %v592 = vlog2.pop %v550
      %v593 = vmul.f32 %v592, 0.6931472
      %v594 = vlog2.pop %v553
      %v595 = vmul.f32 %v594, 0.6931472
      %v596 = vlog2.pop %v556
      %v597 = vmul.f32 %v596, 0.6931472
      %v598 = vlog2.pop %v559
      %v599 = vmul.f32 %v598, 0.6931472
      %v600 = vlog2.pop %v562
      %v601 = vmul.f32 %v600, 0.6931472
      %v602 = vlog2.pop %v565
      %v603 = vmul.f32 %v602, 0.6931472
      %v604 = vlog2.pop %v568
      %v605 = vmul.f32 %v604, 0.6931472
      %v606 = vlog2.pop %v571
      %v607 = vmul.f32 %v606, 0.6931472
      %v608 = vlog2.pop %v574
      %v609 = vmul.f32 %v608, 0.6931472
      %v610 = vlog2.pop %v577
      %v611 = vmul.f32 %v610, 0.6931472
      %v612 = vlog2.pop %v580
      %v613 = vmul.f32 %v612, 0.6931472
      %v614 = vlog2.pop %v583
      %v615 = vmul.f32 %v614, 0.6931472
      %v616 = vadd.f32 %v585, %v202
      %v617 = vadd.f32 %v587, %v205
      %v618 = vadd.f32 %v589, %v208
      %v619 = vadd.f32 %v591, %v211
      %v620 = vadd.f32 %v593, %v214
      %v621 = vadd.f32 %v595, %v217
      %v622 = vadd.f32 %v597, %v220
      %v623 = vadd.f32 %v599, %v223
      %v624 = vadd.f32 %v601, %v226
      %v625 = vadd.f32 %v603, %v229
      %v626 = vadd.f32 %v605, %v232
      %v627 = vadd.f32 %v607, %v235
      %v628 = vadd.f32 %v609, %v238
      %v629 = vadd.f32 %v611, %v241
      %v630 = vadd.f32 %v613, %v244
      %v631 = vadd.f32 %v615, %v247
      %v632 = vmul.f32 %v250, 0.00390625
      %v633 = vmul.f32 %v253, 0.00390625
      %v634 = vmul.f32 %v256, 0.00390625
      %v635 = vmul.f32 %v259, 0.00390625
      %v636 = vmul.f32 %v262, 0.00390625
      %v637 = vmul.f32 %v265, 0.00390625
      %v638 = vmul.f32 %v268, 0.00390625
      %v639 = vmul.f32 %v271, 0.00390625
      %v640 = vmul.f32 %v274, 0.00390625
      %v641 = vmul.f32 %v277, 0.00390625
      %v642 = vmul.f32 %v280, 0.00390625
      %v643 = vmul.f32 %v283, 0.00390625
      %v644 = vmul.f32 %v286, 0.00390625
      %v645 = vmul.f32 %v289, 0.00390625
      %v646 = vmul.f32 %v292, 0.00390625
      %v647 = vmul.f32 %v295, 0.00390625
      %v648 = vsub.f32 %v616, %v632
      %v649 = vsub.f32 %v617, %v633
      %v650 = vsub.f32 %v618, %v634
      %v651 = vsub.f32 %v619, %v635
      %v652 = vsub.f32 %v620, %v636
      %v653 = vsub.f32 %v621, %v637
      %v654 = vsub.f32 %v622, %v638
      %v655 = vsub.f32 %v623, %v639
      %v656 = vsub.f32 %v624, %v640
      %v657 = vsub.f32 %v625, %v641
      %v658 = vsub.f32 %v626, %v642
      %v659 = vsub.f32 %v627, %v643
      %v660 = vsub.f32 %v628, %v644
      %v661 = vsub.f32 %v629, %v645
      %v662 = vsub.f32 %v630, %v646
      %v663 = vsub.f32 %v631, %v647
      %s664 = smul.u32 %s26, 128
      %v665 = vlaneseq
      %v666 = vshrl.u32 %v665, 7
      %v667 = vadd.s32 %v666, 8
      %v668 = vadd.s32 %v666, 16
      %v669 = vadd.s32 %v666, 24
      %v670 = vadd.s32 %v666, 32
      %v671 = vadd.s32 %v666, 40
      %v672 = vadd.s32 %v666, 48
      %v673 = vadd.s32 %v666, 56
      %v674 = vadd.s32 %v666, 64
      %v675 = vadd.s32 %v666, 72
      %v676 = vadd.s32 %v666, 80
      %v677 = vadd.s32 %v666, 88
      %v678 = vadd.s32 %v666, 96
      %v679 = vadd.s32 %v666, 104
      %v680 = vadd.s32 %v666, 112
      %v681 = vadd.s32 %v666, 120
      %v682 = vstv %s664
      %v683 = vadd.s32 %v682, %v666
      %v684 = vadd.s32 %v682, %v667
      %v685 = vadd.s32 %v682, %v668
      %v686 = vadd.s32 %v682, %v669
      %v687 = vadd.s32 %v682, %v670
      %v688 = vadd.s32 %v682, %v671
      %v689 = vadd.s32 %v682, %v672
      %v690 = vadd.s32 %v682, %v673
      %v691 = vadd.s32 %v682, %v674
      %v692 = vadd.s32 %v682, %v675
      %v693 = vadd.s32 %v682, %v676
      %v694 = vadd.s32 %v682, %v677
      %v695 = vadd.s32 %v682, %v678
      %v696 = vadd.s32 %v682, %v679
      %v697 = vadd.s32 %v682, %v680
      %v698 = vadd.s32 %v682, %v681
      %s699 = sld [smem:[#allocation3 + %s25]]
      %v700 = vstv %s699
      %vm701 = vcmp.eq.s32.totalorder %v683, %v700
      %vm702 = vcmp.eq.s32.totalorder %v684, %v700
      %vm703 = vcmp.eq.s32.totalorder %v685, %v700
      %vm704 = vcmp.eq.s32.totalorder %v686, %v700
      %vm705 = vcmp.eq.s32.totalorder %v687, %v700
      %vm706 = vcmp.eq.s32.totalorder %v688, %v700
      %vm707 = vcmp.eq.s32.totalorder %v689, %v700
      %vm708 = vcmp.eq.s32.totalorder %v690, %v700
      %vm709 = vcmp.eq.s32.totalorder %v691, %v700
      %vm710 = vcmp.eq.s32.totalorder %v692, %v700
      %vm711 = vcmp.eq.s32.totalorder %v693, %v700
      %vm712 = vcmp.eq.s32.totalorder %v694, %v700
      %vm713 = vcmp.eq.s32.totalorder %v695, %v700
      %vm714 = vcmp.eq.s32.totalorder %v696, %v700
      %vm715 = vcmp.eq.s32.totalorder %v697, %v700
      %vm716 = vcmp.eq.s32.totalorder %v698, %v700
      %v717 = vsel %vm701, -inf, %v250
      %v718 = vsel %vm702, -inf, %v253
      %v719 = vsel %vm703, -inf, %v256
      %v720 = vsel %vm704, -inf, %v259
      %v721 = vsel %vm705, -inf, %v262
      %v722 = vsel %vm706, -inf, %v265
      %v723 = vsel %vm707, -inf, %v268
      %v724 = vsel %vm708, -inf, %v271
      %v725 = vsel %vm709, -inf, %v274
      %v726 = vsel %vm710, -inf, %v277
      %v727 = vsel %vm711, -inf, %v280
      %v728 = vsel %vm712, -inf, %v283
      %v729 = vsel %vm713, -inf, %v286
      %v730 = vsel %vm714, -inf, %v289
      %v731 = vsel %vm715, -inf, %v292
      %v732 = vsel %vm716, -inf, %v295
      %v733 = vsel %vm701, 0.0, %v394
      %v734 = vsel %vm702, 0.0, %v397
      %v735 = vsel %vm703, 0.0, %v400
      %v736 = vsel %vm704, 0.0, %v403
      %v737 = vsel %vm705, 0.0, %v406
      %v738 = vsel %vm706, 0.0, %v409
      %v739 = vsel %vm707, 0.0, %v412
      %v740 = vsel %vm708, 0.0, %v415
      %v741 = vsel %vm709, 0.0, %v418
      %v742 = vsel %vm710, 0.0, %v421
      %v743 = vsel %vm711, 0.0, %v424
      %v744 = vsel %vm712, 0.0, %v427
      %v745 = vsel %vm713, 0.0, %v430
      %v746 = vsel %vm714, 0.0, %v433
      %v747 = vsel %vm715, 0.0, %v436
      %v748 = vsel %vm716, 0.0, %v439
      %vm749 = vcmask 7168
      %750 = vst.msk [vmem:[%s166] sm:$0xff] %vm749, %v648
      %751 = vst.msk [vmem:[%s166 + $0x8] sm:$0xff] %vm749, %v649
      %752 = vst.msk [vmem:[%s166 + $0x10] sm:$0xff] %vm749, %v650
      %753 = vst.msk [vmem:[%s166 + $0x18] sm:$0xff] %vm749, %v651
      %754 = vst.msk [vmem:[%s166 + $0x20] sm:$0xff] %vm749, %v652
      %755 = vst.msk [vmem:[%s166 + $0x28] sm:$0xff] %vm749, %v653
      %756 = vst.msk [vmem:[%s166 + $0x30] sm:$0xff] %vm749, %v654
      %757 = vst.msk [vmem:[%s166 + $0x38] sm:$0xff] %vm749, %v655
      %758 = vst.msk [vmem:[%s166 + $0x40] sm:$0xff] %vm749, %v656
      %759 = vst.msk [vmem:[%s166 + $0x48] sm:$0xff] %vm749, %v657
      %760 = vst.msk [vmem:[%s166 + $0x50] sm:$0xff] %vm749, %v658
      %761 = vst.msk [vmem:[%s166 + $0x58] sm:$0xff] %vm749, %v659
      %762 = vst.msk [vmem:[%s166 + $0x60] sm:$0xff] %vm749, %v660
      %763 = vst.msk [vmem:[%s166 + $0x68] sm:$0xff] %vm749, %v661
      %764 = vst.msk [vmem:[%s166 + $0x70] sm:$0xff] %vm749, %v662
      %765 = vst.msk [vmem:[%s166 + $0x78] sm:$0xff] %vm749, %v663
      %vm766 = vcmask 15368
      %767 = vst.msk [vmem:[%s166] sm:$0xff] %vm766, %v717
      %768 = vst.msk [vmem:[%s166 + $0x8] sm:$0xff] %vm766, %v718
      %769 = vst.msk [vmem:[%s166 + $0x10] sm:$0xff] %vm766, %v719
      %770 = vst.msk [vmem:[%s166 + $0x18] sm:$0xff] %vm766, %v720
      %771 = vst.msk [vmem:[%s166 + $0x20] sm:$0xff] %vm766, %v721
      %772 = vst.msk [vmem:[%s166 + $0x28] sm:$0xff] %vm766, %v722
      %773 = vst.msk [vmem:[%s166 + $0x30] sm:$0xff] %vm766, %v723
      %774 = vst.msk [vmem:[%s166 + $0x38] sm:$0xff] %vm766, %v724
      %775 = vst.msk [vmem:[%s166 + $0x40] sm:$0xff] %vm766, %v725
      %776 = vst.msk [vmem:[%s166 + $0x48] sm:$0xff] %vm766, %v726
      %777 = vst.msk [vmem:[%s166 + $0x50] sm:$0xff] %vm766, %v727
      %778 = vst.msk [vmem:[%s166 + $0x58] sm:$0xff] %vm766, %v728
      %779 = vst.msk [vmem:[%s166 + $0x60] sm:$0xff] %vm766, %v729
      %780 = vst.msk [vmem:[%s166 + $0x68] sm:$0xff] %vm766, %v730
      %781 = vst.msk [vmem:[%s166 + $0x70] sm:$0xff] %vm766, %v731
      %782 = vst.msk [vmem:[%s166 + $0x78] sm:$0xff] %vm766, %v732
      %vm783 = vcmask 23568
      %784 = vst.msk [vmem:[%s166] sm:$0xff] %vm783, %v733
      %785 = vst.msk [vmem:[%s166 + $0x8] sm:$0xff] %vm783, %v734
      %786 = vst.msk [vmem:[%s166 + $0x10] sm:$0xff] %vm783, %v735
      %787 = vst.msk [vmem:[%s166 + $0x18] sm:$0xff] %vm783, %v736
      %788 = vst.msk [vmem:[%s166 + $0x20] sm:$0xff] %vm783, %v737
      %789 = vst.msk [vmem:[%s166 + $0x28] sm:$0xff] %vm783, %v738
      %790 = vst.msk [vmem:[%s166 + $0x30] sm:$0xff] %vm783, %v739
      %791 = vst.msk [vmem:[%s166 + $0x38] sm:$0xff] %vm783, %v740
      %792 = vst.msk [vmem:[%s166 + $0x40] sm:$0xff] %vm783, %v741
      %793 = vst.msk [vmem:[%s166 + $0x48] sm:$0xff] %vm783, %v742
      %794 = vst.msk [vmem:[%s166 + $0x50] sm:$0xff] %vm783, %v743
      %795 = vst.msk [vmem:[%s166 + $0x58] sm:$0xff] %vm783, %v744
      %796 = vst.msk [vmem:[%s166 + $0x60] sm:$0xff] %vm783, %v745
      %797 = vst.msk [vmem:[%s166 + $0x68] sm:$0xff] %vm783, %v746
      %798 = vst.msk [vmem:[%s166 + $0x70] sm:$0xff] %vm783, %v747
      %799 = vst.msk [vmem:[%s166 + $0x78] sm:$0xff] %vm783, %v748
      %s800 = smul.u32 16, %s26
      %p801 = scmp.lt.s32.totalorder %s25, 1
      %s802 = scalar_select %p801, %s25, 1
      %p803 = scmp.lt.s32.totalorder %s800, 15
      %s804 = scalar_select %p803, %s800, 15
      %s805 = smul.addr %s802, 16
      %s806 = sadd.s32 %s804, %s805
      %s807 = smul.addr %s806, 8
      %s808 = scalar_lea.vmem %s2, %s807
      // Predicated region
      $region25: #{cam_loss_kd_topk.1} parent=23 // pred_check
        %p809 = pneg %p81
      $region26: #{cam_loss_kd_topk.1} parent=23 // pred_check_branch
        %811 = sbr.rel (%p809) target = $region28
      $region27: #{cam_loss_kd_topk.1} parent=23 // pred_region
        %s812 = smul.u32 16, %s26
      $region28: #{cam_loss_kd_topk.1} parent=23 // pred_fallthru
        _
    $region24: #{cam_loss_kd_topk.1} parent=5 // pred_fallthru
      _
    %p813 = scmp.le.s32.totalorder 2, %s16
    // Predicated region
    $region29: #{cam_loss_kd_topk.1} parent=5 // pred_check
      %p814 = pneg %p813
    $region30: #{cam_loss_kd_topk.1} parent=5 // pred_check_branch
      %816 = sbr.rel (%p814) target = $region32
    $region31: #{cam_loss_kd_topk.1} parent=5 // pred_region
      %s817 = ssub.s32 %s16, 2
      // Predicated region
      $region33: #{cam_loss_kd_topk.1} parent=31 // pred_check
        %p818 = pneg %p87
      $region34: #{cam_loss_kd_topk.1} parent=31 // pred_check_branch
        %820 = sbr.rel (%p818) target = $region36
      $region35: #{cam_loss_kd_topk.1} parent=31 // pred_region
        %s821 = smul.u32 16, %s28
        %p822 = scmp.lt.s32.totalorder %s27, 1
        %s823 = scalar_select %p822, %s27, 1
        %p824 = scmp.lt.s32.totalorder %s821, 15
        %s825 = scalar_select %p824, %s821, 15
        %s826 = smul.addr %s823, 16
        %s827 = sadd.s32 %s825, %s826
        %s828 = smul.addr %s827, 8
        %s829 = scalar_lea.vmem %s2, %s828
      $region36: #{cam_loss_kd_topk.1} parent=31 // pred_fallthru
        _
    $region32: #{cam_loss_kd_topk.1} parent=5 // pred_fallthru
      _
  $region6: #{cam_loss_kd_topk.1} parent=0 // loop_footer
    %s20 = sadd.s32 1, %s16
  $region7: #{cam_loss_kd_topk.1} parent=0 // loop_footer_branch
    %15 = sbr.rel target = $region3
  $region8: #{cam_loss_kd_topk.1} parent=0 // loop_exit
    _

</llo_original>
